<compile_context>
chip_gen: v7x
topology: tpu7x:2x2x1
jax: 0.10.0
libtpu: 0.0.40
codegen_flags: <defaults>
</compile_context>

<pallas_src>
import functools
import math

import jax
import jax.numpy as jnp
from jax.experimental import pallas as pl
from jax.experimental.pallas import tpu as pltpu


# ------------------------- weight quantization (glue, tiny tensors, plain JAX) -------------------------
def quantize_mask(mask_val, mask_bit):
    if mask_bit == 1:                       # BinarizeFn  (0 maps to -1, same as PyTorch)
        return ((mask_val > 0).astype(jnp.float32) - 0.5) * 2.0
    elif mask_bit == 2:                     # TernarizeFn
        return (mask_val > 0.7).astype(jnp.float32) - (mask_val < -0.7).astype(jnp.float32)
    elif mask_bit == 3:                     # Threebits
        mean = jnp.mean(jnp.abs(mask_val))
        pos = ((mask_val > 3.0 * mean / 4.0).astype(jnp.float32) * 2
               + (mask_val > 1.5 * mean / 4.0).astype(jnp.float32)
               + (mask_val > 0.7 * mean / 4.0).astype(jnp.float32))
        neg = ((mask_val < -3.0 * mean / 4.0).astype(jnp.float32) * 2
               + (mask_val < -1.5 * mean / 4.0).astype(jnp.float32)
               + (mask_val < -0.7 * mean / 4.0).astype(jnp.float32))
        return pos - neg
    else:                                   # HigherBitsFn
        max_val = jnp.max(jnp.abs(mask_val))
        div_cuts = (2.0 ** mask_bit - 2.0) / 2.0
        return jnp.round(mask_val / max_val * div_cuts) / div_cuts


# ------------------------------------------- Pallas kernel ---------------------------------------------
def _maskconv_kernel(x_ref, w_ref, b_ref, o_ref, *scratch,
                     kh_sz, kw_sz, stride, dilation, padding, th, w_out):
    # x_ref : (1, H, W, C_in)        un-padded NHWC image; same block across row-tiles (resident)
    # w_ref : (KH*KW*C_in, C_out)    im2col-folded quantized weights (compute_dtype)
    # b_ref : (1, C_out)             bias, f32
    # o_ref : (1, TH*W_out, C_out)   flattened (h, w) output rows of this tile, f32
    # scratch[0] : (H+2p, W+2p, C_in) VMEM padded-image scratch (only when padding > 0)
    hi = pl.program_id(1)
    h_img, w_img, c_in = x_ref.shape[1], x_ref.shape[2], x_ref.shape[3]

    if padding > 0:
        xpad_ref = scratch[0]

        @pl.when(hi == 0)                  # build the zero-padded image once per batch element
        def _():
            xpad_ref[...] = jnp.zeros(xpad_ref.shape, xpad_ref.dtype)
            xpad_ref[padding:padding + h_img, padding:padding + w_img, :] = x_ref[0]

        x_src = xpad_ref
    else:
        x_src = x_ref.at[0]

    # Rows of the (padded) input covered by this tile of TH output rows, including the tap halo.
    th_in = (th - 1) * stride + (kh_sz - 1) * dilation + 1
    h_base = pl.multiple_of(hi * (th * stride), th * stride)
    xt = x_src[pl.ds(h_base, th_in), :, :]                         # (th_in, W_pad, C_in)

    # im2col: fold every tap into the contraction axis -> a single MXU matmul for this tile.
    taps = []
    for kh in range(kh_sz):                                         # static, small: unrolled
        for kw in range(kw_sz):
            h0 = kh * dilation
            w0 = kw * dilation
            taps.append(xt[h0:h0 + (th - 1) * stride + 1:stride,
                           w0:w0 + (w_out - 1) * stride + 1:stride, :])   # (th, w_out, c_in)
    patches = jnp.concatenate(taps, axis=-1)                        # (th, w_out, KH*KW*C_in)
    patches = patches.reshape(th * w_out, kh_sz * kw_sz * c_in)     # (M, K), M multiple of 8

    acc = jnp.dot(patches.astype(w_ref.dtype), w_ref[...],          # one (M,K)x(K,C_out) matmul
                  preferred_element_type=jnp.float32)
    acc = acc + b_ref[...]                                          # (1, C_out) broadcast, f32
    o_ref[0] = acc.astype(o_ref.dtype)


def _pick_row_tile(h_out, w_out):
    """Output-row tile TH: aim for M = TH*W_out ~ 256 (MXU-aligned) while keeping >=2 row tiles
    when possible so the pipeline has steps to overlap and both v7x TensorCores get work."""
    target = max(1, 256 // max(w_out, 1))
    divisors = [d for d in range(1, h_out + 1) if h_out % d == 0]
    fitting = [d for d in divisors if d <= target]
    th = max(fitting) if fitting else 1
    if th == h_out and h_out > 1:
        smaller = [d for d in divisors if d < h_out]
        th = max(smaller) if smaller else th
    return th


# ---------------------------------------------- wrapper ------------------------------------------------
def mask_conv2d(x_nchw, weight_oihw, bias, *, stride=1, padding=0, dilation=1,
                compute_dtype=jnp.float32):
    """Conv body of MaskConv2d (groups=1). x: [N,C,H,W] f32 -> out: [N,O,H',W'] f32."""
    # TODO(synk): groups > 1 is not implemented (module default groups=1 is what we reproduce).
    n, c_in, h, w = x_nchw.shape
    c_out, c_in_w, kh_sz, kw_sz = weight_oihw.shape
    assert c_in == c_in_w, "groups != 1 is not supported"

    h_out = (h + 2 * padding - dilation * (kh_sz - 1) - 1) // stride + 1
    w_out = (w + 2 * padding - dilation * (kw_sz - 1) - 1) // stride + 1
    assert h_out > 0 and w_out > 0

    th = _pick_row_tile(h_out, w_out)
    n_row_tiles = h_out // th
    m_tile = th * w_out

    # Layout glue: activation NCHW -> NHWC (channel contraction on lanes); weight OIHW folded to
    # (KH*KW*C_in, C_out) matching the kernel's (kh, kw, c) im2col ordering.  Weight is tiny.
    x_nhwc = jnp.transpose(x_nchw, (0, 2, 3, 1))
    w_folded = jnp.transpose(weight_oihw, (2, 3, 1, 0)).reshape(
        kh_sz * kw_sz * c_in, c_out).astype(compute_dtype)
    b2d = bias.reshape(1, c_out).astype(jnp.float32)

    kernel = functools.partial(
        _maskconv_kernel, kh_sz=kh_sz, kw_sz=kw_sz, stride=stride,
        dilation=dilation, padding=padding, th=th, w_out=w_out)

    scratch_shapes = []
    if padding > 0:
        scratch_shapes.append(
            pltpu.VMEM((h + 2 * padding, w + 2 * padding, c_in), x_nhwc.dtype))

    # The padded-image scratch carries state across the row-tile axis, so that axis stays
    # "arbitrary"; the batch axis is "parallel" (megacore sharding on v7x).
    dim_sems = ("parallel", "arbitrary") if padding > 0 else ("parallel", "parallel")

    out_flat = pl.pallas_call(
        kernel,
        out_shape=jax.ShapeDtypeStruct((n, h_out * w_out, c_out), jnp.float32),
        grid_spec=pltpu.PrefetchScalarGridSpec(
            num_scalar_prefetch=0,
            grid=(n, n_row_tiles),
            in_specs=[
                # Whole (un-padded) image per batch element; identical block index across row
                # tiles so it is DMA'd once per image and stays resident in VMEM.
                pl.BlockSpec((1, h, w, c_in), lambda b, hi: (b, 0, 0, 0)),
                pl.BlockSpec((kh_sz * kw_sz * c_in, c_out), lambda b, hi: (0, 0)),
                pl.BlockSpec((1, c_out), lambda b, hi: (0, 0)),
            ],
            out_specs=pl.BlockSpec((1, m_tile, c_out), lambda b, hi: (b, hi, 0)),
            scratch_shapes=scratch_shapes,
        ),
        compiler_params=pltpu.CompilerParams(
            dimension_semantics=dim_sems,
            vmem_limit_bytes=32 * 1024 * 1024,   # tiles sized well under v7x's 64 MiB VMEM
        ),
    )(x_nhwc, w_folded, b2d)

    # (N, H_out*W_out, C_out) -> NCHW for the PyTorch-facing boundary (reshape is free).
    return jnp.transpose(out_flat.reshape(n, h_out, w_out, c_out), (0, 3, 1, 2))


def mask_conv2d_forward(x, mask_val, coef, bias, *, stride=1, padding=0, dilation=1,
                        mask_bit=1, compute_dtype=jnp.float32):
    """Full MaskConv2d.forward(): quantize mask, scale by coef, run the Pallas conv."""
    weight = quantize_mask(mask_val, mask_bit) * coef          # (O, I, KH, KW)
    return mask_conv2d(x, weight, bias, stride=stride, padding=padding,
                       dilation=dilation, compute_dtype=compute_dtype)


# ------------------------------------------------ demo -------------------------------------------------
if __name__ == "__main__":
    in_channels, out_channels, kernel_size = 4, 8, 3
    stride, padding, dilation = 1, 1, 1
    batch, spatial = 2, 16

    key = jax.random.PRNGKey(0)
    k_mask, k_coef, k_bias, k_x = jax.random.split(key, 4)

    # Parameter init mirroring the PyTorch module: mask_val ~ N(0,1); coef, bias ~ U(-stdv, stdv).
    n_fan = in_channels * kernel_size * kernel_size
    stdv = 1.0 / math.sqrt(n_fan)
    mask_val = jax.random.normal(
        k_mask, (out_channels, in_channels, kernel_size, kernel_size), dtype=jnp.float32)
    coef = jax.random.uniform(k_coef, (out_channels, in_channels, 1, 1),
                              minval=-stdv, maxval=stdv, dtype=jnp.float32)
    bias = jax.random.uniform(k_bias, (out_channels,), minval=-stdv, maxval=stdv,
                              dtype=jnp.float32)
    x = jax.random.normal(k_x, (batch, in_channels, spatial, spatial), dtype=jnp.float32)

    def conv_ref(weight):
        return jax.lax.conv_general_dilated(
            x, weight, window_strides=(stride, stride),
            padding=[(padding, padding), (padding, padding)],
            rhs_dilation=(dilation, dilation),
            dimension_numbers=("NCHW", "OIHW", "NCHW"),
        ) + bias[None, :, None, None]

    # 1) default mask_bit=1 (BinarizeFn), f32 compute -- strict check vs the XLA conv reference.
    out = mask_conv2d_forward(x, mask_val, coef, bias, stride=stride, padding=padding,
                              dilation=dilation, mask_bit=1)
    out = jax.block_until_ready(out)
    ref = conv_ref(quantize_mask(mask_val, 1) * coef)
    assert out.shape == ref.shape == (batch, out_channels, spatial, spatial)
    assert jnp.allclose(out, ref, atol=1e-4, rtol=1e-4), "Pallas MaskConv2d (mask_bit=1) mismatch"

    # 2) Threebits branch (mask_bit=3), f32 compute.
    out3 = jax.block_until_ready(
        mask_conv2d_forward(x, mask_val, coef, bias, stride=stride, padding=padding,
                            dilation=dilation, mask_bit=3))
    ref3 = conv_ref(quantize_mask(mask_val, 3) * coef)
    assert jnp.allclose(out3, ref3, atol=1e-4, rtol=1e-4), "Pallas MaskConv2d (mask_bit=3) mismatch"

    # 3) bf16 MXU-input path (f32 accumulation), loose check vs the f32 reference.
    out_bf16 = jax.block_until_ready(
        mask_conv2d_forward(x, mask_val, coef, bias, stride=stride, padding=padding,
                            dilation=dilation, mask_bit=1, compute_dtype=jnp.bfloat16))
    assert jnp.allclose(out_bf16, ref, atol=1e-1, rtol=5e-2), "bf16 compute path mismatch"

    print("KERNEL_OK")
</pallas_src>

<mosaic_0001>
module attributes {stable_mosaic.version = 11 : i64} {
  func.func @_maskconv_kernel(%arg0: i32, %arg1: i32, %arg2: memref<1x16x16x4xf32, #tpu.memory_space<vmem>>, %arg3: memref<36x8xf32, #tpu.memory_space<vmem>>, %arg4: memref<1x8xf32, #tpu.memory_space<vmem>>, %arg5: memref<1x128x8xf32, #tpu.memory_space<vmem>>, %arg6: memref<18x18x4xf32, #tpu.memory_space<vmem>>) attributes {dimension_semantics = [#tpu.dimension_semantics<parallel>, #tpu.dimension_semantics<arbitrary>], iteration_bounds = array<i64: 2, 2>, scalar_prefetch = 0 : i64, scratch_operands = 1 : i64, tpu.core_type = #tpu.core_type<tc>, window_params = [{transform_indices = @transform_0, window_bounds = array<i64: 1, 16, 16, 4>}, {pipeline_mode = #tpu.pipeline_mode<synchronous>, transform_indices = @transform_1, window_bounds = array<i64: 36, 8>}, {pipeline_mode = #tpu.pipeline_mode<synchronous>, transform_indices = @transform_2, window_bounds = array<i64: 1, 8>}, {transform_indices = @transform_3, window_bounds = array<i64: 1, 128, 8>}]} {
    %c0_i32 = arith.constant 0 : i32
    %0 = arith.cmpi eq, %arg1, %c0_i32 : i32
    %1 = arith.extui %0 : i1 to i32
    %c0_i32_0 = arith.constant 0 : i32
    %2 = arith.cmpi ne, %1, %c0_i32_0 : i32
    scf.if %2 {
      %cst_9 = arith.constant 0.000000e+00 : f32
      %26 = vector.broadcast %cst_9 : f32 to vector<18x18x4xf32>
      %c0_10 = arith.constant 0 : index
      %c0_11 = arith.constant 0 : index
      %c0_12 = arith.constant 0 : index
      %27 = vector.load %arg6[%c0_10, %c0_11, %c0_12] : memref<18x18x4xf32, #tpu.memory_space<vmem>>, vector<18x18x4xf32>
      tpu.vector_store %arg6[%c0_10, %c0_11, %c0_12], %26 {strides = array<i32>} : memref<18x18x4xf32, #tpu.memory_space<vmem>>, vector<18x18x4xf32>,
      %c0_13 = arith.constant 0 : index
      %c0_14 = arith.constant 0 : index
      %c0_15 = arith.constant 0 : index
      %c0_16 = arith.constant 0 : index
      %28 = vector.load %arg2[%c0_13, %c0_14, %c0_15, %c0_16] : memref<1x16x16x4xf32, #tpu.memory_space<vmem>>, vector<1x16x16x4xf32>
      %29 = vector.shape_cast %28 : vector<1x16x16x4xf32> to vector<16x16x4xf32>
      %c1 = arith.constant 1 : index
      %c1_17 = arith.constant 1 : index
      %c0_18 = arith.constant 0 : index
      %30 = vector.load %arg6[%c1, %c1_17, %c0_18] : memref<18x18x4xf32, #tpu.memory_space<vmem>>, vector<16x16x4xf32>
      tpu.vector_store %arg6[%c1, %c1_17, %c0_18], %29 {strides = array<i32>} : memref<18x18x4xf32, #tpu.memory_space<vmem>>, vector<16x16x4xf32>,
    } else {
    }
    %c8_i32 = arith.constant 8 : i32
    %3 = arith.muli %arg1, %c8_i32 : i32
    %4 = tpu.assume_multiple %3, 8 : i32
    %5 = arith.index_cast %4 : i32 to index
    %c0 = arith.constant 0 : index
    %c0_1 = arith.constant 0 : index
    %6 = vector.load %arg6[%5, %c0, %c0_1] : memref<18x18x4xf32, #tpu.memory_space<vmem>>, vector<10x18x4xf32>
    %7 = vector.extract_strided_slice %6 {offsets = [0, 0, 0], sizes = [8, 16, 4], strides = [1, 1, 1]} : vector<10x18x4xf32> to vector<8x16x4xf32>
    %8 = vector.extract_strided_slice %6 {offsets = [0, 1, 0], sizes = [8, 16, 4], strides = [1, 1, 1]} : vector<10x18x4xf32> to vector<8x16x4xf32>
    %9 = vector.extract_strided_slice %6 {offsets = [0, 2, 0], sizes = [8, 16, 4], strides = [1, 1, 1]} : vector<10x18x4xf32> to vector<8x16x4xf32>
    %10 = vector.extract_strided_slice %6 {offsets = [1, 0, 0], sizes = [8, 16, 4], strides = [1, 1, 1]} : vector<10x18x4xf32> to vector<8x16x4xf32>
    %11 = vector.extract_strided_slice %6 {offsets = [1, 1, 0], sizes = [8, 16, 4], strides = [1, 1, 1]} : vector<10x18x4xf32> to vector<8x16x4xf32>
    %12 = vector.extract_strided_slice %6 {offsets = [1, 2, 0], sizes = [8, 16, 4], strides = [1, 1, 1]} : vector<10x18x4xf32> to vector<8x16x4xf32>
    %13 = vector.extract_strided_slice %6 {offsets = [2, 0, 0], sizes = [8, 16, 4], strides = [1, 1, 1]} : vector<10x18x4xf32> to vector<8x16x4xf32>
    %14 = vector.extract_strided_slice %6 {offsets = [2, 1, 0], sizes = [8, 16, 4], strides = [1, 1, 1]} : vector<10x18x4xf32> to vector<8x16x4xf32>
    %15 = vector.extract_strided_slice %6 {offsets = [2, 2, 0], sizes = [8, 16, 4], strides = [1, 1, 1]} : vector<10x18x4xf32> to vector<8x16x4xf32>
    %16 = tpu.concatenate %7, %8, %9, %10, %11, %12, %13, %14, %15 in 2 : vector<8x16x4xf32>, vector<8x16x4xf32>, vector<8x16x4xf32>, vector<8x16x4xf32>, vector<8x16x4xf32>, vector<8x16x4xf32>, vector<8x16x4xf32>, vector<8x16x4xf32>, vector<8x16x4xf32> -> vector<8x16x36xf32>
    %17 = vector.shape_cast %16 : vector<8x16x36xf32> to vector<128x36xf32>
    %c0_2 = arith.constant 0 : index
    %c0_3 = arith.constant 0 : index
    %18 = vector.load %arg3[%c0_2, %c0_3] : memref<36x8xf32, #tpu.memory_space<vmem>>, vector<36x8xf32>
    %cst = arith.constant dense<0.000000e+00> : vector<128x8xf32>
    %19 = tpu.matmul %17, %18, %cst {dimension_numbers = #tpu.dot_dimension_numbers<[1], [0], [0], [1], [0, 0, 1, 1], [], []>} : vector<128x36xf32>, vector<36x8xf32>, vector<128x8xf32> -> vector<128x8xf32>
    %c0_4 = arith.constant 0 : index
    %c0_5 = arith.constant 0 : index
    %20 = vector.load %arg4[%c0_4, %c0_5] : memref<1x8xf32, #tpu.memory_space<vmem>>, vector<1x8xf32>
    %21 = vector.broadcast %20 : vector<1x8xf32> to vector<128x8xf32>
    %22 = arith.addf %19, %21 : vector<128x8xf32>
    %c0_6 = arith.constant 0 : index
    %c0_7 = arith.constant 0 : index
    %c0_8 = arith.constant 0 : index
    %23 = vector.load %arg5[%c0_6, %c0_7, %c0_8] : memref<1x128x8xf32, #tpu.memory_space<vmem>>, vector<1x128x8xf32>
    %24 = vector.shape_cast %23 : vector<1x128x8xf32> to vector<128x8xf32>
    %25 = vector.shape_cast %22 : vector<128x8xf32> to vector<1x128x8xf32>
    tpu.vector_store %arg5[%c0_6, %c0_7, %c0_8], %25 {strides = array<i32>} : memref<1x128x8xf32, #tpu.memory_space<vmem>>, vector<1x128x8xf32>,
    return
  }
  func.func @transform_0(%arg0: i32, %arg1: i32) -> (i32, i32, i32, i32) {
    %c0_i32 = arith.constant 0 : i32
    %c0_i32_0 = arith.constant 0 : i32
    %c0_i32_1 = arith.constant 0 : i32
    %c0_i32_2 = arith.constant 0 : i32
    return %arg0, %c0_i32, %c0_i32_0, %c0_i32_1 : i32, i32, i32, i32
  }
  func.func @transform_1(%arg0: i32, %arg1: i32) -> (i32, i32) {
    %c0_i32 = arith.constant 0 : i32
    %c0_i32_0 = arith.constant 0 : i32
    %c0_i32_1 = arith.constant 0 : i32
    return %c0_i32, %c0_i32_0 : i32, i32
  }
  func.func @transform_2(%arg0: i32, %arg1: i32) -> (i32, i32) {
    %c0_i32 = arith.constant 0 : i32
    %c0_i32_0 = arith.constant 0 : i32
    %c0_i32_1 = arith.constant 0 : i32
    return %c0_i32, %c0_i32_0 : i32, i32
  }
  func.func @transform_3(%arg0: i32, %arg1: i32) -> (i32, i32, i32) {
    %c0_i32 = arith.constant 0 : i32
    %c0_i32_0 = arith.constant 0 : i32
    return %arg0, %arg1, %c0_i32 : i32, i32, i32
  }
}

</mosaic_0001>

<llo_original>
// kernel: tpu_custom_call.1
$region0: #{tpu_custom_call.1}
  #allocation0 [shape = 'u32[]', space=smem, size = 0x4, offset = 0x4, fixed_abs, tag = 'smem constant byte address 0x4 - core index']
  #allocation1 [shape = 'u32[144,128]{1,0:T(1,128)}', space=vmem, size = 0x12000, scoped, tag = 'internal scratch']
  #allocation2 [shape = 'f32[18,18,4]{2,1,0:T(8,128)}', space=vmem, size = 0x36000, scoped, tag = 'scratch operand']
  %s0 = inlined_call_operand.vmem [shape: f32[2,16,16,4], index: 0, kind: input, shape index: {}]
  %s1 = inlined_call_operand.vmem [shape: f32[36,8], index: 1, kind: input, shape index: {}]
  %s2 = inlined_call_operand.vmem [shape: f32[1,8], index: 2, kind: input, shape index: {}]
  %s3 = inlined_call_operand.vmem [shape: f32[2,256,8], index: 3, kind: output, shape index: {}]
  %s4 = sld [smem:[#allocation0]]
  $region49: #{tpu_custom_call.1} parent=0
    _
  %s6 = ssub.s32 1, %s4
  %s7 = scalar_select 0, %s6, %s4
  loop: start=0, step=1, limit=6
  $region2: #{tpu_custom_call.1} parent=0 // loop_pre_header
    _
  $region3: #{tpu_custom_call.1} parent=0 // loop_header
    %s9 = sphi 0, %s13
    %p10 = scmp.ge.s32.totalorder %s9, 6
    %s16 = sphi 0, %s28
    %s17 = sphi 0, %s24
    %s18 = sphi 0, %s16
    %s19 = sphi 0, %s17
    %s20 = sphi 0, %s18
    %s21 = sphi 0, %s19
    %s31 = sphi 0, %s33
    %s34 = sphi 0, %s31
    %s35 = sphi 0, %s34
    %s51 = sphi 0, %s35
    %s55 = sphi 0, %s55
    %s57 = sphi 0, %s55
    %s58 = sphi 0, %s57
    %s72 = sphi 0, %s58
    %s76 = sphi 0, %s76
    %s78 = sphi 0, %s76
    %s79 = sphi 0, %s78
    %s93 = sphi 0, %s79
    %s101 = sphi 0, %s103
    %s104 = sphi 0, %s101
    %s105 = sphi 0, %s104
    %s121 = sphi 0, %s105
  $region4: #{tpu_custom_call.1} parent=0 // loop_header_branch
    %12 = sbr.rel (%p10) target = $region8
  $region5: #{tpu_custom_call.1} parent=0 // loop_body
    %s14 = ssub.s32 %s9, 1
    %s15 = ssub.s32 %s9, 2
    %s22 = sadd.s32 1, %s17
    %p23 = scmp.ge.s32.totalorder %s22, 2
    %s24 = scalar_select %p23, 0, %s22
    %s25 = sadd.s32 1, %s16
    %s26 = scalar_select %p23, %s25, %s16
    %p27 = scmp.ge.s32.totalorder %s26, 2
    %s28 = scalar_select %p27, 0, %s26
    %s29 = ssub.s32 %s16, %s28
    %p30 = scmp.eq.s32.totalorder %s29, 0
    %s32 = sadd.s32 %s31, 1
    %s33 = scalar_select %p30, %s31, %s32
    %p36 = pneg %p30
    %p37 = scmp.eq.s32.totalorder %s9, 3
    %p38 = por %p36, %p37
    %p39 = scmp.ne.s32.totalorder %s31, %s34
    %p40 = scmp.eq.s32.totalorder %s9, 0
    %p41 = por %p39, %p40
    %p42 = scmp.ne.s32.totalorder %s31, %s34
    %p43 = scmp.eq.s32.totalorder %s14, 3
    %p44 = por %p42, %p43
    %p45 = scmp.ne.s32.totalorder %s34, %s35
    %p46 = scmp.eq.s32.totalorder %s14, 0
    %p47 = por %p45, %p46
    %p48 = scmp.ne.s32.totalorder %s34, %s35
    %p49 = scmp.eq.s32.totalorder %s15, 3
    %p50 = por %p48, %p49
    %p52 = scmp.ne.s32.totalorder %s35, %s51
    %p53 = scmp.eq.s32.totalorder %s15, 0
    %p54 = por %p52, %p53
    %s56 = sadd.s32 %s55, 1
    %p59 = scmp.eq.s32.totalorder %s9, 3
    %p60 = scmp.ne.s32.totalorder %s55, %s57
    %p61 = scmp.eq.s32.totalorder %s9, 0
    %p62 = por %p60, %p61
    %p63 = scmp.ne.s32.totalorder %s55, %s57
    %p64 = scmp.eq.s32.totalorder %s14, 3
    %p65 = por %p63, %p64
    %p66 = scmp.ne.s32.totalorder %s57, %s58
    %p67 = scmp.eq.s32.totalorder %s14, 0
    %p68 = por %p66, %p67
    %p69 = scmp.ne.s32.totalorder %s57, %s58
    %p70 = scmp.eq.s32.totalorder %s15, 3
    %p71 = por %p69, %p70
    %p73 = scmp.ne.s32.totalorder %s58, %s72
    %p74 = scmp.eq.s32.totalorder %s15, 0
    %p75 = por %p73, %p74
    %s77 = sadd.s32 %s76, 1
    %p80 = scmp.eq.s32.totalorder %s9, 3
    %p81 = scmp.ne.s32.totalorder %s76, %s78
    %p82 = scmp.eq.s32.totalorder %s9, 0
    %p83 = por %p81, %p82
    %p84 = scmp.ne.s32.totalorder %s76, %s78
    %p85 = scmp.eq.s32.totalorder %s14, 3
    %p86 = por %p84, %p85
    %p87 = scmp.ne.s32.totalorder %s78, %s79
    %p88 = scmp.eq.s32.totalorder %s14, 0
    %p89 = por %p87, %p88
    %p90 = scmp.ne.s32.totalorder %s78, %s79
    %p91 = scmp.eq.s32.totalorder %s15, 3
    %p92 = por %p90, %p91
    %p94 = scmp.ne.s32.totalorder %s79, %s93
    %p95 = scmp.eq.s32.totalorder %s15, 0
    %p96 = por %p94, %p95
    %s97 = ssub.s32 %s16, %s28
    %s98 = ssub.s32 %s17, %s24
    %s99 = sor.u32 %s97, %s98
    %p100 = scmp.eq.s32.totalorder %s99, 0
    %s102 = sadd.s32 %s101, 1
    %s103 = scalar_select %p100, %s101, %s102
    %p106 = pneg %p100
    %p107 = scmp.eq.s32.totalorder %s9, 3
    %p108 = por %p106, %p107
    %p109 = scmp.ne.s32.totalorder %s101, %s104
    %p110 = scmp.eq.s32.totalorder %s9, 0
    %p111 = por %p109, %p110
    %p112 = scmp.ne.s32.totalorder %s101, %s104
    %p113 = scmp.eq.s32.totalorder %s14, 3
    %p114 = por %p112, %p113
    %p115 = scmp.ne.s32.totalorder %s104, %s105
    %p116 = scmp.eq.s32.totalorder %s14, 0
    %p117 = por %p115, %p116
    %p118 = scmp.ne.s32.totalorder %s104, %s105
    %p119 = scmp.eq.s32.totalorder %s15, 3
    %p120 = por %p118, %p119
    %p122 = scmp.ne.s32.totalorder %s105, %s121
    %p123 = scmp.eq.s32.totalorder %s15, 0
    %p124 = por %p122, %p123
    %p125 = scmp.le.s32.totalorder 1, %s9
    %p126 = scmp.lt.s32.totalorder %s9, 5
    %p127 = pnand %p125, %p126
    %p128 = pneg %p127
    // Predicated region
    $region9: #{tpu_custom_call.1} parent=5 // pred_check
      _
    $region10: #{tpu_custom_call.1} parent=5 // pred_check_branch
      %130 = sbr.rel (%p127) target = $region12
    $region11: #{tpu_custom_call.1} parent=5 // pred_region
      %s131 = ssub.s32 %s9, 1
      // Predicated region
      $region13: #{tpu_custom_call.1} parent=11 // pred_check
        %p132 = pneg %p68
      $region14: #{tpu_custom_call.1} parent=11 // pred_check_branch
        %134 = sbr.rel (%p132) target = $region16
      $region15: #{tpu_custom_call.1} parent=11 // pred_region
        _
      $region16: #{tpu_custom_call.1} parent=11 // pred_fallthru
        _
      // Predicated region
      $region17: #{tpu_custom_call.1} parent=11 // pred_check
        %p135 = pneg %p89
      $region18: #{tpu_custom_call.1} parent=11 // pred_check_branch
        %137 = sbr.rel (%p135) target = $region20
      $region19: #{tpu_custom_call.1} parent=11 // pred_region
        _
      $region20: #{tpu_custom_call.1} parent=11 // pred_fallthru
        _
    $region12: #{tpu_custom_call.1} parent=5 // pred_fallthru
      _
    %p138 = scmp.lt.s32.totalorder %s9, 4
    // Predicated region
    $region21: #{tpu_custom_call.1} parent=5 // pred_check
      %p139 = pneg %p138
    $region22: #{tpu_custom_call.1} parent=5 // pred_check_branch
      %141 = sbr.rel (%p139) target = $region24
    $region23: #{tpu_custom_call.1} parent=5 // pred_region
      // Predicated region
      $region25: #{tpu_custom_call.1} parent=23 // pred_check
        %p142 = pneg %p41
      $region26: #{tpu_custom_call.1} parent=23 // pred_check_branch
        %144 = sbr.rel (%p142) target = $region28
      $region27: #{tpu_custom_call.1} parent=23 // pred_region
        %p145 = scmp.lt.s32.totalorder %s16, 1
        %s146 = scalar_select %p145, %s16, 1
        %s147 = smul.addr %s146, 32
        %s148 = smul.addr %s147, 8
        %s149 = scalar_lea.vmem %s0, %s148
      $region28: #{tpu_custom_call.1} parent=23 // pred_fallthru
        _
    $region24: #{tpu_custom_call.1} parent=5 // pred_fallthru
      _
    %p150 = scmp.le.s32.totalorder 1, %s9
    %p151 = scmp.lt.s32.totalorder %s9, 5
    %p152 = pnand %p150, %p151
    %p153 = pneg %p152
    // Predicated region
    $region29: #{tpu_custom_call.1} parent=5 // pred_check
      _
    $region30: #{tpu_custom_call.1} parent=5 // pred_check_branch
      %155 = sbr.rel (%p152) target = $region32
    $region31: #{tpu_custom_call.1} parent=5 // pred_region
      %s156 = ssub.s32 %s9, 1
      %p157 = scmp.lt.s32.totalorder %s18, 1
      %s158 = scalar_select %p157, %s18, 1
      %s159 = smul.addr %s158, 32
      %s160 = smul.addr %s159, 8
      %s161 = scalar_lea.vmem %s0, %s160
      %p162 = pneg %p47
      %p163 = pneg %p44
      %p164 = pneg %p68
      %p165 = pneg %p65
      %p166 = pneg %p89
      %p167 = pneg %p86
      %p168 = pneg %p117
      %p169 = pneg %p114
      %s170 = smul.u32 16, %s19
      %p171 = scmp.lt.s32.totalorder %s18, 1
      %s172 = scalar_select %p171, %s18, 1
      %p173 = scmp.lt.s32.totalorder %s170, 31
      %s174 = scalar_select %p173, %s170, 31
      %s175 = smul.addr %s172, 32
      %s176 = sadd.s32 %s174, %s175
      %s177 = smul.addr %s176, 8
      %s178 = scalar_lea.vmem %s3, %s177
      %p179 = scmp.lt.s32.totalorder %s18, 1
      %s180 = scalar_select %p179, %s18, 1
      %s181 = smul.addr %s180, 32
      %s182 = smul.addr %s181, 8
      %s183 = scalar_lea.vmem %s0, %s182
      %s184 = smul.u32 16, %s19
      %p185 = scmp.lt.s32.totalorder %s18, 1
      %s186 = scalar_select %p185, %s18, 1
      %p187 = scmp.lt.s32.totalorder %s184, 31
      %s188 = scalar_select %p187, %s184, 31
      %s189 = smul.addr %s186, 32
      %s190 = sadd.s32 %s188, %s189
      %s191 = smul.addr %s190, 8
      %s192 = scalar_lea.vmem %s3, %s191
      %s193 = smul.u32 16, %s19
      %p194 = scmp.eq.s32.totalorder %s19, 0
      // Predicated region
      $region33: #{tpu_custom_call.1} parent=31 // pred_check
        %p195 = pneg %p194
      $region34: #{tpu_custom_call.1} parent=31 // pred_check_branch
        %197 = sbr.rel (%p195) target = $region36
      $region35: #{tpu_custom_call.1} parent=31 // pred_region
        %vm198 = vcmask 31744
        %199 = vst.msk [vmem:[#allocation2] sm:$0xff] %vm198, 0.0
        %200 = vst.msk [vmem:[#allocation2 + $0x8] sm:$0xff] %vm198, 0.0
        %vm201 = vcmask 25600
        %202 = vst.msk [vmem:[#allocation2 + $0x10] sm:$0x3] %vm201, 0.0
        %203 = vst.msk [vmem:[#allocation2 + $0x18] sm:$0xff] %vm198, 0.0
        %204 = vst.msk [vmem:[#allocation2 + $0x20] sm:$0xff] %vm198, 0.0
        %205 = vst.msk [vmem:[#allocation2 + $0x28] sm:$0x3] %vm201, 0.0
        %206 = vst.msk [vmem:[#allocation2 + $0x30] sm:$0xff] %vm198, 0.0
        %207 = vst.msk [vmem:[#allocation2 + $0x38] sm:$0xff] %vm198, 0.0
        %208 = vst.msk [vmem:[#allocation2 + $0x40] sm:$0x3] %vm201, 0.0
        %209 = vst.msk [vmem:[#allocation2 + $0x48] sm:$0xff] %vm198, 0.0
        %210 = vst.msk [vmem:[#allocation2 + $0x50] sm:$0xff] %vm198, 0.0
        %211 = vst.msk [vmem:[#allocation2 + $0x58] sm:$0x3] %vm201, 0.0
        %212 = vst.msk [vmem:[#allocation2 + $0x60] sm:$0xff] %vm198, 0.0
        %213 = vst.msk [vmem:[#allocation2 + $0x68] sm:$0xff] %vm198, 0.0
        %214 = vst.msk [vmem:[#allocation2 + $0x70] sm:$0x3] %vm201, 0.0
        %215 = vst.msk [vmem:[#allocation2 + $0x78] sm:$0xff] %vm198, 0.0
        %216 = vst.msk [vmem:[#allocation2 + $0x80] sm:$0xff] %vm198, 0.0
        %217 = vst.msk [vmem:[#allocation2 + $0x88] sm:$0x3] %vm201, 0.0
        %218 = vst.msk [vmem:[#allocation2 + $0x90] sm:$0xff] %vm198, 0.0
        %219 = vst.msk [vmem:[#allocation2 + $0x98] sm:$0xff] %vm198, 0.0
        %220 = vst.msk [vmem:[#allocation2 + $0xa0] sm:$0x3] %vm201, 0.0
        %221 = vst.msk [vmem:[#allocation2 + $0xa8] sm:$0xff] %vm198, 0.0
        %222 = vst.msk [vmem:[#allocation2 + $0xb0] sm:$0xff] %vm198, 0.0
        %223 = vst.msk [vmem:[#allocation2 + $0xb8] sm:$0x3] %vm201, 0.0
        %224 = vst.msk [vmem:[#allocation2 + $0xc0] sm:$0xff] %vm198, 0.0
        %225 = vst.msk [vmem:[#allocation2 + $0xc8] sm:$0xff] %vm198, 0.0
        %226 = vst.msk [vmem:[#allocation2 + $0xd0] sm:$0x3] %vm201, 0.0
        %227 = vst.msk [vmem:[#allocation2 + $0xd8] sm:$0xff] %vm198, 0.0
        %228 = vst.msk [vmem:[#allocation2 + $0xe0] sm:$0xff] %vm198, 0.0
        %229 = vst.msk [vmem:[#allocation2 + $0xe8] sm:$0x3] %vm201, 0.0
        %230 = vst.msk [vmem:[#allocation2 + $0xf0] sm:$0xff] %vm198, 0.0
        %231 = vst.msk [vmem:[#allocation2 + $0xf8] sm:$0xff] %vm198, 0.0
        %232 = vst.msk [vmem:[#allocation2 + $0x100] sm:$0x3] %vm201, 0.0
        %233 = vst.msk [vmem:[#allocation2 + $0x108] sm:$0xff] %vm198, 0.0
        %234 = vst.msk [vmem:[#allocation2 + $0x110] sm:$0xff] %vm198, 0.0
        %235 = vst.msk [vmem:[#allocation2 + $0x118] sm:$0x3] %vm201, 0.0
        %236 = vst.msk [vmem:[#allocation2 + $0x120] sm:$0xff] %vm198, 0.0
        %237 = vst.msk [vmem:[#allocation2 + $0x128] sm:$0xff] %vm198, 0.0
        %238 = vst.msk [vmem:[#allocation2 + $0x130] sm:$0x3] %vm201, 0.0
        %239 = vst.msk [vmem:[#allocation2 + $0x138] sm:$0xff] %vm198, 0.0
        %240 = vst.msk [vmem:[#allocation2 + $0x140] sm:$0xff] %vm198, 0.0
        %241 = vst.msk [vmem:[#allocation2 + $0x148] sm:$0x3] %vm201, 0.0
        %242 = vst.msk [vmem:[#allocation2 + $0x150] sm:$0xff] %vm198, 0.0
        %243 = vst.msk [vmem:[#allocation2 + $0x158] sm:$0xff] %vm198, 0.0
        %244 = vst.msk [vmem:[#allocation2 + $0x160] sm:$0x3] %vm201, 0.0
        %245 = vst.msk [vmem:[#allocation2 + $0x168] sm:$0xff] %vm198, 0.0
        %246 = vst.msk [vmem:[#allocation2 + $0x170] sm:$0xff] %vm198, 0.0
        %247 = vst.msk [vmem:[#allocation2 + $0x178] sm:$0x3] %vm201, 0.0
        %248 = vst.msk [vmem:[#allocation2 + $0x180] sm:$0xff] %vm198, 0.0
        %249 = vst.msk [vmem:[#allocation2 + $0x188] sm:$0xff] %vm198, 0.0
        %250 = vst.msk [vmem:[#allocation2 + $0x190] sm:$0x3] %vm201, 0.0
        %251 = vst.msk [vmem:[#allocation2 + $0x198] sm:$0xff] %vm198, 0.0
        %252 = vst.msk [vmem:[#allocation2 + $0x1a0] sm:$0xff] %vm198, 0.0
        %253 = vst.msk [vmem:[#allocation2 + $0x1a8] sm:$0x3] %vm201, 0.0
        %v254 = vld [vmem:[%s183] sm:$0xff]
        %v255 = vld [vmem:[%s183 + $0x8] sm:$0xff]
        %v256 = vld [vmem:[%s183 + $0x10] sm:$0xff]
        %v257 = vld [vmem:[%s183 + $0x18] sm:$0xff]
        %v258 = vld [vmem:[%s183 + $0x20] sm:$0xff]
        %v259 = vld [vmem:[%s183 + $0x28] sm:$0xff]
        %v260 = vld [vmem:[%s183 + $0x30] sm:$0xff]
        %v261 = vld [vmem:[%s183 + $0x38] sm:$0xff]
        %v262 = vld [vmem:[%s183 + $0x40] sm:$0xff]
        %v263 = vld [vmem:[%s183 + $0x48] sm:$0xff]
        %v264 = vld [vmem:[%s183 + $0x50] sm:$0xff]
        %v265 = vld [vmem:[%s183 + $0x58] sm:$0xff]
        %v266 = vld [vmem:[%s183 + $0x60] sm:$0xff]
        %v267 = vld [vmem:[%s183 + $0x68] sm:$0xff]
        %v268 = vld [vmem:[%s183 + $0x70] sm:$0xff]
        %v269 = vld [vmem:[%s183 + $0x78] sm:$0xff]
        %v270 = vld [vmem:[%s183 + $0x80] sm:$0xff]
        %v271 = vld [vmem:[%s183 + $0x88] sm:$0xff]
        %v272 = vld [vmem:[%s183 + $0x90] sm:$0xff]
        %v273 = vld [vmem:[%s183 + $0x98] sm:$0xff]
        %v274 = vld [vmem:[%s183 + $0xa0] sm:$0xff]
        %v275 = vld [vmem:[%s183 + $0xa8] sm:$0xff]
        %v276 = vld [vmem:[%s183 + $0xb0] sm:$0xff]
        %v277 = vld [vmem:[%s183 + $0xb8] sm:$0xff]
        %v278 = vld [vmem:[%s183 + $0xc0] sm:$0xff]
        %v279 = vld [vmem:[%s183 + $0xc8] sm:$0xff]
        %v280 = vld [vmem:[%s183 + $0xd0] sm:$0xff]
        %v281 = vld [vmem:[%s183 + $0xd8] sm:$0xff]
        %v282 = vld [vmem:[%s183 + $0xe0] sm:$0xff]
        %v283 = vld [vmem:[%s183 + $0xe8] sm:$0xff]
        %v284 = vld [vmem:[%s183 + $0xf0] sm:$0xff]
        %v285 = vld [vmem:[%s183 + $0xf8] sm:$0xff]
        %s286 = scalar_lea.vmem [#allocation2], 24
        %287 = vst.msk [vmem:[%s286 + $0x1] sm:$0xff] %vm198, %v254
        %288 = vst.msk [vmem:[%s286 + $0x9] sm:$0xff] %vm198, %v255
        %289 = vst.msk [vmem:[%s286 + $0x19] sm:$0xff] %vm198, %v256
        %290 = vst.msk [vmem:[%s286 + $0x21] sm:$0xff] %vm198, %v257
        %291 = vst.msk [vmem:[%s286 + $0x31] sm:$0xff] %vm198, %v258
        %292 = vst.msk [vmem:[%s286 + $0x39] sm:$0xff] %vm198, %v259
        %293 = vst.msk [vmem:[%s286 + $0x49] sm:$0xff] %vm198, %v260
        %294 = vst.msk [vmem:[%s286 + $0x51] sm:$0xff] %vm198, %v261
        %295 = vst.msk [vmem:[%s286 + $0x61] sm:$0xff] %vm198, %v262
        %296 = vst.msk [vmem:[%s286 + $0x69] sm:$0xff] %vm198, %v263
        %297 = vst.msk [vmem:[%s286 + $0x79] sm:$0xff] %vm198, %v264
        %298 = vst.msk [vmem:[%s286 + $0x81] sm:$0xff] %vm198, %v265
        %299 = vst.msk [vmem:[%s286 + $0x91] sm:$0xff] %vm198, %v266
        %300 = vst.msk [vmem:[%s286 + $0x99] sm:$0xff] %vm198, %v267
        %301 = vst.msk [vmem:[%s286 + $0xa9] sm:$0xff] %vm198, %v268
        %302 = vst.msk [vmem:[%s286 + $0xb1] sm:$0xff] %vm198, %v269
        %303 = vst.msk [vmem:[%s286 + $0xc1] sm:$0xff] %vm198, %v270
        %304 = vst.msk [vmem:[%s286 + $0xc9] sm:$0xff] %vm198, %v271
        %305 = vst.msk [vmem:[%s286 + $0xd9] sm:$0xff] %vm198, %v272
        %306 = vst.msk [vmem:[%s286 + $0xe1] sm:$0xff] %vm198, %v273
        %307 = vst.msk [vmem:[%s286 + $0xf1] sm:$0xff] %vm198, %v274
        %308 = vst.msk [vmem:[%s286 + $0xf9] sm:$0xff] %vm198, %v275
        %309 = vst.msk [vmem:[%s286 + $0x109] sm:$0xff] %vm198, %v276
        %310 = vst.msk [vmem:[%s286 + $0x111] sm:$0xff] %vm198, %v277
        %311 = vst.msk [vmem:[%s286 + $0x121] sm:$0xff] %vm198, %v278
        %312 = vst.msk [vmem:[%s286 + $0x129] sm:$0xff] %vm198, %v279
        %313 = vst.msk [vmem:[%s286 + $0x139] sm:$0xff] %vm198, %v280
        %314 = vst.msk [vmem:[%s286 + $0x141] sm:$0xff] %vm198, %v281
        %315 = vst.msk [vmem:[%s286 + $0x151] sm:$0xff] %vm198, %v282
        %316 = vst.msk [vmem:[%s286 + $0x159] sm:$0xff] %vm198, %v283
        %317 = vst.msk [vmem:[%s286 + $0x169] sm:$0xff] %vm198, %v284
        %318 = vst.msk [vmem:[%s286 + $0x171] sm:$0xff] %vm198, %v285
      $region36: #{tpu_custom_call.1} parent=31 // pred_fallthru
        _
      %s319 = smul.u32 %s19, 8
      %s320 = smul.u32 %s319, 24
      %s321 = scalar_lea.vmem [#allocation2], %s320
      %v322 = vld [vmem:[%s321] sm:$0xff]
      %v323 = vld [vmem:[%s321 + $0x8] sm:$0xff]
      %v324 = vld [vmem:[%s321 + $0x10] sm:$0x3]
      %v325 = vld [vmem:[%s321 + $0x18] sm:$0xff]
      %v326 = vld [vmem:[%s321 + $0x20] sm:$0xff]
      %v327 = vld [vmem:[%s321 + $0x28] sm:$0x3]
      %v328 = vld [vmem:[%s321 + $0x30] sm:$0xff]
      %v329 = vld [vmem:[%s321 + $0x38] sm:$0xff]
      %v330 = vld [vmem:[%s321 + $0x40] sm:$0x3]
      %v331 = vld [vmem:[%s321 + $0x48] sm:$0xff]
      %v332 = vld [vmem:[%s321 + $0x50] sm:$0xff]
      %v333 = vld [vmem:[%s321 + $0x58] sm:$0x3]
      %v334 = vld [vmem:[%s321 + $0x60] sm:$0xff]
      %v335 = vld [vmem:[%s321 + $0x68] sm:$0xff]
      %v336 = vld [vmem:[%s321 + $0x70] sm:$0x3]
      %v337 = vld [vmem:[%s321 + $0x78] sm:$0xff]
      %v338 = vld [vmem:[%s321 + $0x80] sm:$0xff]
      %v339 = vld [vmem:[%s321 + $0x88] sm:$0x3]
      %v340 = vld [vmem:[%s321 + $0x90] sm:$0xff]
      %v341 = vld [vmem:[%s321 + $0x98] sm:$0xff]
      %v342 = vld [vmem:[%s321 + $0xa0] sm:$0x3]
      %v343 = vld [vmem:[%s321 + $0xa8] sm:$0xff]
      %v344 = vld [vmem:[%s321 + $0xb0] sm:$0xff]
      %v345 = vld [vmem:[%s321 + $0xb8] sm:$0x3]
      %v346 = vld [vmem:[%s321 + $0xc0] sm:$0xff]
      %v347 = vld [vmem:[%s321 + $0xc8] sm:$0xff]
      %v348 = vld [vmem:[%s321 + $0xd0] sm:$0x3]
      %v349 = vld [vmem:[%s321 + $0xd8] sm:$0xff]
      %v350 = vld [vmem:[%s321 + $0xe0] sm:$0xff]
      %v351 = vld [vmem:[%s321 + $0xe8] sm:$0x3]
      %vm376 = vcmask 1046528
      %v377 = vrot.slane %v322, 1
      %v378 = vrot.slane %v323, 1
      %v379 = vsel %vm376, %v377, %v378
      %v380 = vrot.slane %v324, 1
      %v381 = vsel %vm376, %v378, %v380
      %v382 = vrot.slane %v325, 1
      %v383 = vrot.slane %v326, 1
      %v384 = vsel %vm376, %v382, %v383
      %v385 = vrot.slane %v327, 1
      %v386 = vsel %vm376, %v383, %v385
      %v387 = vrot.slane %v328, 1
      %v388 = vrot.slane %v329, 1
      %v389 = vsel %vm376, %v387, %v388
      %v390 = vrot.slane %v330, 1
      %v391 = vsel %vm376, %v388, %v390
      %v392 = vrot.slane %v331, 1
      %v393 = vrot.slane %v332, 1
      %v394 = vsel %vm376, %v392, %v393
      %v395 = vrot.slane %v333, 1
      %v396 = vsel %vm376, %v393, %v395
      %v397 = vrot.slane %v334, 1
      %v398 = vrot.slane %v335, 1
      %v399 = vsel %vm376, %v397, %v398
      %v400 = vrot.slane %v336, 1
      %v401 = vsel %vm376, %v398, %v400
      %v402 = vrot.slane %v337, 1
      %v403 = vrot.slane %v338, 1
      %v404 = vsel %vm376, %v402, %v403
      %v405 = vrot.slane %v339, 1
      %v406 = vsel %vm376, %v403, %v405
      %v407 = vrot.slane %v340, 1
      %v408 = vrot.slane %v341, 1
      %v409 = vsel %vm376, %v407, %v408
      %v410 = vrot.slane %v342, 1
      %v411 = vsel %vm376, %v408, %v410
      %v412 = vrot.slane %v343, 1
      %v413 = vrot.slane %v344, 1
      %v414 = vsel %vm376, %v412, %v413
      %v415 = vrot.slane %v345, 1
      %v416 = vsel %vm376, %v413, %v415
      %417 = vrot.lane.b32.xlu0 %v379, 4
      %v418 = vpop.permute.xlu0 %417
      %419 = vrot.lane.b32.xlu0 %v381, 4
      %v420 = vpop.permute.xlu0 %419
      %421 = vrot.lane.b32.xlu0 %v384, 4
      %v422 = vpop.permute.xlu0 %421
      %423 = vrot.lane.b32.xlu0 %v386, 4
      %v424 = vpop.permute.xlu0 %423
      %425 = vrot.lane.b32.xlu0 %v389, 4
      %v426 = vpop.permute.xlu0 %425
      %427 = vrot.lane.b32.xlu0 %v391, 4
      %v428 = vpop.permute.xlu0 %427
      %429 = vrot.lane.b32.xlu0 %v394, 4
      %v430 = vpop.permute.xlu0 %429
      %431 = vrot.lane.b32.xlu0 %v396, 4
      %v432 = vpop.permute.xlu0 %431
      %433 = vrot.lane.b32.xlu0 %v399, 4
      %v434 = vpop.permute.xlu0 %433
      %435 = vrot.lane.b32.xlu0 %v401, 4
      %v436 = vpop.permute.xlu0 %435
      %437 = vrot.lane.b32.xlu0 %v404, 4
      %v438 = vpop.permute.xlu0 %437
      %439 = vrot.lane.b32.xlu0 %v406, 4
      %v440 = vpop.permute.xlu0 %439
      %441 = vrot.lane.b32.xlu0 %v409, 4
      %v442 = vpop.permute.xlu0 %441
      %443 = vrot.lane.b32.xlu0 %v411, 4
      %v444 = vpop.permute.xlu0 %443
      %445 = vrot.lane.b32.xlu0 %v414, 4
      %v446 = vpop.permute.xlu0 %445
      %447 = vrot.lane.b32.xlu0 %v416, 4
      %v448 = vpop.permute.xlu0 %447
      %vm465 = vcmask 1045504
      %v466 = vrot.slane %v322, 2
      %v467 = vrot.slane %v323, 2
      %v468 = vsel %vm465, %v466, %v467
      %v469 = vrot.slane %v324, 2
      %v470 = vsel %vm465, %v467, %v469
      %v471 = vrot.slane %v325, 2
      %v472 = vrot.slane %v326, 2
      %v473 = vsel %vm465, %v471, %v472
      %v474 = vrot.slane %v327, 2
      %v475 = vsel %vm465, %v472, %v474
      %v476 = vrot.slane %v328, 2
      %v477 = vrot.slane %v329, 2
      %v478 = vsel %vm465, %v476, %v477
      %v479 = vrot.slane %v330, 2
      %v480 = vsel %vm465, %v477, %v479
      %v481 = vrot.slane %v331, 2
      %v482 = vrot.slane %v332, 2
      %v483 = vsel %vm465, %v481, %v482
      %v484 = vrot.slane %v333, 2
      %v485 = vsel %vm465, %v482, %v484
      %v486 = vrot.slane %v334, 2
      %v487 = vrot.slane %v335, 2
      %v488 = vsel %vm465, %v486, %v487
      %v489 = vrot.slane %v336, 2
      %v490 = vsel %vm465, %v487, %v489
      %v491 = vrot.slane %v337, 2
      %v492 = vrot.slane %v338, 2
      %v493 = vsel %vm465, %v491, %v492
      %v494 = vrot.slane %v339, 2
      %v495 = vsel %vm465, %v492, %v494
      %v496 = vrot.slane %v340, 2
      %v497 = vrot.slane %v341, 2
      %v498 = vsel %vm465, %v496, %v497
      %v499 = vrot.slane %v342, 2
      %v500 = vsel %vm465, %v497, %v499
      %v501 = vrot.slane %v343, 2
      %v502 = vrot.slane %v344, 2
      %v503 = vsel %vm465, %v501, %v502
      %v504 = vrot.slane %v345, 2
      %v505 = vsel %vm465, %v502, %v504
      %506 = vrot.lane.b32.xlu0 %v468, 8
      %v507 = vpop.permute.xlu0 %506
      %508 = vrot.lane.b32.xlu0 %v470, 8
      %v509 = vpop.permute.xlu0 %508
      %510 = vrot.lane.b32.xlu0 %v473, 8
      %v511 = vpop.permute.xlu0 %510
      %512 = vrot.lane.b32.xlu0 %v475, 8
      %v513 = vpop.permute.xlu0 %512
      %514 = vrot.lane.b32.xlu0 %v478, 8
      %v515 = vpop.permute.xlu0 %514
      %516 = vrot.lane.b32.xlu0 %v480, 8
      %v517 = vpop.permute.xlu0 %516
      %518 = vrot.lane.b32.xlu0 %v483, 8
      %v519 = vpop.permute.xlu0 %518
      %520 = vrot.lane.b32.xlu0 %v485, 8
      %v521 = vpop.permute.xlu0 %520
      %522 = vrot.lane.b32.xlu0 %v488, 8
      %v523 = vpop.permute.xlu0 %522
      %524 = vrot.lane.b32.xlu0 %v490, 8
      %v525 = vpop.permute.xlu0 %524
      %526 = vrot.lane.b32.xlu0 %v493, 8
      %v527 = vpop.permute.xlu0 %526
      %528 = vrot.lane.b32.xlu0 %v495, 8
      %v529 = vpop.permute.xlu0 %528
      %530 = vrot.lane.b32.xlu0 %v498, 8
      %v531 = vpop.permute.xlu0 %530
      %532 = vrot.lane.b32.xlu0 %v500, 8
      %v533 = vpop.permute.xlu0 %532
      %534 = vrot.lane.b32.xlu0 %v503, 8
      %v535 = vpop.permute.xlu0 %534
      %536 = vrot.lane.b32.xlu0 %v505, 8
      %v537 = vpop.permute.xlu0 %536
      %556 = vrot.lane.b32.xlu0 %v325, 12
      %v557 = vpop.permute.xlu0 %556
      %558 = vrot.lane.b32.xlu0 %v326, 12
      %v559 = vpop.permute.xlu0 %558
      %560 = vrot.lane.b32.xlu0 %v328, 12
      %v561 = vpop.permute.xlu0 %560
      %562 = vrot.lane.b32.xlu0 %v329, 12
      %v563 = vpop.permute.xlu0 %562
      %564 = vrot.lane.b32.xlu0 %v331, 12
      %v565 = vpop.permute.xlu0 %564
      %566 = vrot.lane.b32.xlu0 %v332, 12
      %v567 = vpop.permute.xlu0 %566
      %568 = vrot.lane.b32.xlu0 %v334, 12
      %v569 = vpop.permute.xlu0 %568
      %570 = vrot.lane.b32.xlu0 %v335, 12
      %v571 = vpop.permute.xlu0 %570
      %572 = vrot.lane.b32.xlu0 %v337, 12
      %v573 = vpop.permute.xlu0 %572
      %574 = vrot.lane.b32.xlu0 %v338, 12
      %v575 = vpop.permute.xlu0 %574
      %576 = vrot.lane.b32.xlu0 %v340, 12
      %v577 = vpop.permute.xlu0 %576
      %578 = vrot.lane.b32.xlu0 %v341, 12
      %v579 = vpop.permute.xlu0 %578
      %580 = vrot.lane.b32.xlu0 %v343, 12
      %v581 = vpop.permute.xlu0 %580
      %582 = vrot.lane.b32.xlu0 %v344, 12
      %v583 = vpop.permute.xlu0 %582
      %584 = vrot.lane.b32.xlu0 %v346, 12
      %v585 = vpop.permute.xlu0 %584
      %586 = vrot.lane.b32.xlu0 %v347, 12
      %v587 = vpop.permute.xlu0 %586
      %v605 = vrot.slane %v346, 1
      %v606 = vrot.slane %v347, 1
      %v607 = vsel %vm376, %v605, %v606
      %v608 = vrot.slane %v348, 1
      %v609 = vsel %vm376, %v606, %v608
      %610 = vrot.lane.b32.xlu0 %v384, 16
      %v611 = vpop.permute.xlu0 %610
      %612 = vrot.lane.b32.xlu0 %v386, 16
      %v613 = vpop.permute.xlu0 %612
      %614 = vrot.lane.b32.xlu0 %v389, 16
      %v615 = vpop.permute.xlu0 %614
      %616 = vrot.lane.b32.xlu0 %v391, 16
      %v617 = vpop.permute.xlu0 %616
      %618 = vrot.lane.b32.xlu0 %v394, 16
      %v619 = vpop.permute.xlu0 %618
      %620 = vrot.lane.b32.xlu0 %v396, 16
      %v621 = vpop.permute.xlu0 %620
      %622 = vrot.lane.b32.xlu0 %v399, 16
      %v623 = vpop.permute.xlu0 %622
      %624 = vrot.lane.b32.xlu0 %v401, 16
      %v625 = vpop.permute.xlu0 %624
      %626 = vrot.lane.b32.xlu0 %v404, 16
      %v627 = vpop.permute.xlu0 %626
      %628 = vrot.lane.b32.xlu0 %v406, 16
      %v629 = vpop.permute.xlu0 %628
      %630 = vrot.lane.b32.xlu0 %v409, 16
      %v631 = vpop.permute.xlu0 %630
      %632 = vrot.lane.b32.xlu0 %v411, 16
      %v633 = vpop.permute.xlu0 %632
      %634 = vrot.lane.b32.xlu0 %v414, 16
      %v635 = vpop.permute.xlu0 %634
      %636 = vrot.lane.b32.xlu0 %v416, 16
      %v637 = vpop.permute.xlu0 %636
      %638 = vrot.lane.b32.xlu0 %v607, 16
      %v639 = vpop.permute.xlu0 %638
      %640 = vrot.lane.b32.xlu0 %v609, 16
      %v641 = vpop.permute.xlu0 %640
      %v658 = vrot.slane %v346, 2
      %v659 = vrot.slane %v347, 2
      %v660 = vsel %vm465, %v658, %v659
      %v661 = vrot.slane %v348, 2
      %v662 = vsel %vm465, %v659, %v661
      %663 = vrot.lane.b32.xlu0 %v473, 20
      %v664 = vpop.permute.xlu0 %663
      %665 = vrot.lane.b32.xlu0 %v475, 20
      %v666 = vpop.permute.xlu0 %665
      %667 = vrot.lane.b32.xlu0 %v478, 20
      %v668 = vpop.permute.xlu0 %667
      %669 = vrot.lane.b32.xlu0 %v480, 20
      %v670 = vpop.permute.xlu0 %669
      %671 = vrot.lane.b32.xlu0 %v483, 20
      %v672 = vpop.permute.xlu0 %671
      %673 = vrot.lane.b32.xlu0 %v485, 20
      %v674 = vpop.permute.xlu0 %673
      %675 = vrot.lane.b32.xlu0 %v488, 20
      %v676 = vpop.permute.xlu0 %675
      %677 = vrot.lane.b32.xlu0 %v490, 20
      %v678 = vpop.permute.xlu0 %677
      %679 = vrot.lane.b32.xlu0 %v493, 20
      %v680 = vpop.permute.xlu0 %679
      %681 = vrot.lane.b32.xlu0 %v495, 20
      %v682 = vpop.permute.xlu0 %681
      %683 = vrot.lane.b32.xlu0 %v498, 20
      %v684 = vpop.permute.xlu0 %683
      %685 = vrot.lane.b32.xlu0 %v500, 20
      %v686 = vpop.permute.xlu0 %685
      %687 = vrot.lane.b32.xlu0 %v503, 20
      %v688 = vpop.permute.xlu0 %687
      %689 = vrot.lane.b32.xlu0 %v505, 20
      %v690 = vpop.permute.xlu0 %689
      %691 = vrot.lane.b32.xlu0 %v660, 20
      %v692 = vpop.permute.xlu0 %691
      %693 = vrot.lane.b32.xlu0 %v662, 20
      %v694 = vpop.permute.xlu0 %693
      %713 = vrot.lane.b32.xlu0 %v328, 24
      %v714 = vpop.permute.xlu0 %713
      %715 = vrot.lane.b32.xlu0 %v329, 24
      %v716 = vpop.permute.xlu0 %715
      %717 = vrot.lane.b32.xlu0 %v331, 24
      %v718 = vpop.permute.xlu0 %717
      %719 = vrot.lane.b32.xlu0 %v332, 24
      %v720 = vpop.permute.xlu0 %719
      %721 = vrot.lane.b32.xlu0 %v334, 24
      %v722 = vpop.permute.xlu0 %721
      %723 = vrot.lane.b32.xlu0 %v335, 24
      %v724 = vpop.permute.xlu0 %723
      %725 = vrot.lane.b32.xlu0 %v337, 24
      %v726 = vpop.permute.xlu0 %725
      %727 = vrot.lane.b32.xlu0 %v338, 24
      %v728 = vpop.permute.xlu0 %727
      %729 = vrot.lane.b32.xlu0 %v340, 24
      %v730 = vpop.permute.xlu0 %729
      %731 = vrot.lane.b32.xlu0 %v341, 24
      %v732 = vpop.permute.xlu0 %731
      %733 = vrot.lane.b32.xlu0 %v343, 24
      %v734 = vpop.permute.xlu0 %733
      %735 = vrot.lane.b32.xlu0 %v344, 24
      %v736 = vpop.permute.xlu0 %735
      %737 = vrot.lane.b32.xlu0 %v346, 24
      %v738 = vpop.permute.xlu0 %737
      %739 = vrot.lane.b32.xlu0 %v347, 24
      %v740 = vpop.permute.xlu0 %739
      %741 = vrot.lane.b32.xlu0 %v349, 24
      %v742 = vpop.permute.xlu0 %741
      %743 = vrot.lane.b32.xlu0 %v350, 24
      %v744 = vpop.permute.xlu0 %743
      %v762 = vrot.slane %v349, 1
      %v763 = vrot.slane %v350, 1
      %v764 = vsel %vm376, %v762, %v763
      %v765 = vrot.slane %v351, 1
      %v766 = vsel %vm376, %v763, %v765
      %767 = vrot.lane.b32.xlu0 %v389, 28
      %v768 = vpop.permute.xlu0 %767
      %769 = vrot.lane.b32.xlu0 %v391, 28
      %v770 = vpop.permute.xlu0 %769
      %771 = vrot.lane.b32.xlu0 %v394, 28
      %v772 = vpop.permute.xlu0 %771
      %773 = vrot.lane.b32.xlu0 %v396, 28
      %v774 = vpop.permute.xlu0 %773
      %775 = vrot.lane.b32.xlu0 %v399, 28
      %v776 = vpop.permute.xlu0 %775
      %777 = vrot.lane.b32.xlu0 %v401, 28
      %v778 = vpop.permute.xlu0 %777
      %779 = vrot.lane.b32.xlu0 %v404, 28
      %v780 = vpop.permute.xlu0 %779
      %781 = vrot.lane.b32.xlu0 %v406, 28
      %v782 = vpop.permute.xlu0 %781
      %783 = vrot.lane.b32.xlu0 %v409, 28
      %v784 = vpop.permute.xlu0 %783
      %785 = vrot.lane.b32.xlu0 %v411, 28
      %v786 = vpop.permute.xlu0 %785
      %787 = vrot.lane.b32.xlu0 %v414, 28
      %v788 = vpop.permute.xlu0 %787
      %789 = vrot.lane.b32.xlu0 %v416, 28
      %v790 = vpop.permute.xlu0 %789
      %791 = vrot.lane.b32.xlu0 %v607, 28
      %v792 = vpop.permute.xlu0 %791
      %793 = vrot.lane.b32.xlu0 %v609, 28
      %v794 = vpop.permute.xlu0 %793
      %795 = vrot.lane.b32.xlu0 %v764, 28
      %v796 = vpop.permute.xlu0 %795
      %797 = vrot.lane.b32.xlu0 %v766, 28
      %v798 = vpop.permute.xlu0 %797
      %v815 = vrot.slane %v349, 2
      %v816 = vrot.slane %v350, 2
      %v817 = vsel %vm465, %v815, %v816
      %v818 = vrot.slane %v351, 2
      %v819 = vsel %vm465, %v816, %v818
      %820 = vrot.lane.b32.xlu0 %v478, 32
      %v821 = vpop.permute.xlu0 %820
      %822 = vrot.lane.b32.xlu0 %v480, 32
      %v823 = vpop.permute.xlu0 %822
      %824 = vrot.lane.b32.xlu0 %v483, 32
      %v825 = vpop.permute.xlu0 %824
      %826 = vrot.lane.b32.xlu0 %v485, 32
      %v827 = vpop.permute.xlu0 %826
      %828 = vrot.lane.b32.xlu0 %v488, 32
      %v829 = vpop.permute.xlu0 %828
      %830 = vrot.lane.b32.xlu0 %v490, 32
      %v831 = vpop.permute.xlu0 %830
      %832 = vrot.lane.b32.xlu0 %v493, 32
      %v833 = vpop.permute.xlu0 %832
      %834 = vrot.lane.b32.xlu0 %v495, 32
      %v835 = vpop.permute.xlu0 %834
      %836 = vrot.lane.b32.xlu0 %v498, 32
      %v837 = vpop.permute.xlu0 %836
      %838 = vrot.lane.b32.xlu0 %v500, 32
      %v839 = vpop.permute.xlu0 %838
      %840 = vrot.lane.b32.xlu0 %v503, 32
      %v841 = vpop.permute.xlu0 %840
      %842 = vrot.lane.b32.xlu0 %v505, 32
      %v843 = vpop.permute.xlu0 %842
      %844 = vrot.lane.b32.xlu0 %v660, 32
      %v845 = vpop.permute.xlu0 %844
      %846 = vrot.lane.b32.xlu0 %v662, 32
      %v847 = vpop.permute.xlu0 %846
      %848 = vrot.lane.b32.xlu0 %v817, 32
      %v849 = vpop.permute.xlu0 %848
      %850 = vrot.lane.b32.xlu0 %v819, 32
      %v851 = vpop.permute.xlu0 %850
      %vm868 = vcmask 31744
      %v869 = vsel %vm868, %v322, %v418
      %v870 = vsel %vm868, %v323, %v420
      %v871 = vsel %vm868, %v325, %v422
      %v872 = vsel %vm868, %v326, %v424
      %v873 = vsel %vm868, %v328, %v426
      %v874 = vsel %vm868, %v329, %v428
      %v875 = vsel %vm868, %v331, %v430
      %v876 = vsel %vm868, %v332, %v432
      %v877 = vsel %vm868, %v334, %v434
      %v878 = vsel %vm868, %v335, %v436
      %v879 = vsel %vm868, %v337, %v438
      %v880 = vsel %vm868, %v338, %v440
      %v881 = vsel %vm868, %v340, %v442
      %v882 = vsel %vm868, %v341, %v444
      %v883 = vsel %vm868, %v343, %v446
      %v884 = vsel %vm868, %v344, %v448
      %vm885 = vcmask 64512
      %v886 = vsel %vm885, %v869, %v507
      %v887 = vsel %vm885, %v870, %v509
      %v888 = vsel %vm885, %v871, %v511
      %v889 = vsel %vm885, %v872, %v513
      %v890 = vsel %vm885, %v873, %v515
      %v891 = vsel %vm885, %v874, %v517
      %v892 = vsel %vm885, %v875, %v519
      %v893 = vsel %vm885, %v876, %v521
      %v894 = vsel %vm885, %v877, %v523
      %v895 = vsel %vm885, %v878, %v525
      %v896 = vsel %vm885, %v879, %v527
      %v897 = vsel %vm885, %v880, %v529
      %v898 = vsel %vm885, %v881, %v531
      %v899 = vsel %vm885, %v882, %v533
      %v900 = vsel %vm885, %v883, %v535
      %v901 = vsel %vm885, %v884, %v537
      %vm902 = vcmask 97280
      %v903 = vsel %vm902, %v886, %v557
      %v904 = vsel %vm902, %v887, %v559
      %v905 = vsel %vm902, %v888, %v561
      %v906 = vsel %vm902, %v889, %v563
      %v907 = vsel %vm902, %v890, %v565
      %v908 = vsel %vm902, %v891, %v567
      %v909 = vsel %vm902, %v892, %v569
      %v910 = vsel %vm902, %v893, %v571
      %v911 = vsel %vm902, %v894, %v573
      %v912 = vsel %vm902, %v895, %v575
      %v913 = vsel %vm902, %v896, %v577
      %v914 = vsel %vm902, %v897, %v579
      %v915 = vsel %vm902, %v898, %v581
      %v916 = vsel %vm902, %v899, %v583
      %v917 = vsel %vm902, %v900, %v585
      %v918 = vsel %vm902, %v901, %v587
      %vm919 = vcmask 130048
      %v920 = vsel %vm919, %v903, %v611
      %v921 = vsel %vm919, %v904, %v613
      %v922 = vsel %vm919, %v905, %v615
      %v923 = vsel %vm919, %v906, %v617
      %v924 = vsel %vm919, %v907, %v619
      %v925 = vsel %vm919, %v908, %v621
      %v926 = vsel %vm919, %v909, %v623
      %v927 = vsel %vm919, %v910, %v625
      %v928 = vsel %vm919, %v911, %v627
      %v929 = vsel %vm919, %v912, %v629
      %v930 = vsel %vm919, %v913, %v631
      %v931 = vsel %vm919, %v914, %v633
      %v932 = vsel %vm919, %v915, %v635
      %v933 = vsel %vm919, %v916, %v637
      %v934 = vsel %vm919, %v917, %v639
      %v935 = vsel %vm919, %v918, %v641
      %vm936 = vcmask 162816
      %v937 = vsel %vm936, %v920, %v664
      %v938 = vsel %vm936, %v921, %v666
      %v939 = vsel %vm936, %v922, %v668
      %v940 = vsel %vm936, %v923, %v670
      %v941 = vsel %vm936, %v924, %v672
      %v942 = vsel %vm936, %v925, %v674
      %v943 = vsel %vm936, %v926, %v676
      %v944 = vsel %vm936, %v927, %v678
      %v945 = vsel %vm936, %v928, %v680
      %v946 = vsel %vm936, %v929, %v682
      %v947 = vsel %vm936, %v930, %v684
      %v948 = vsel %vm936, %v931, %v686
      %v949 = vsel %vm936, %v932, %v688
      %v950 = vsel %vm936, %v933, %v690
      %v951 = vsel %vm936, %v934, %v692
      %v952 = vsel %vm936, %v935, %v694
      %vm953 = vcmask 195584
      %v954 = vsel %vm953, %v937, %v714
      %v955 = vsel %vm953, %v938, %v716
      %v956 = vsel %vm953, %v939, %v718
      %v957 = vsel %vm953, %v940, %v720
      %v958 = vsel %vm953, %v941, %v722
      %v959 = vsel %vm953, %v942, %v724
      %v960 = vsel %vm953, %v943, %v726
      %v961 = vsel %vm953, %v944, %v728
      %v962 = vsel %vm953, %v945, %v730
      %v963 = vsel %vm953, %v946, %v732
      %v964 = vsel %vm953, %v947, %v734
      %v965 = vsel %vm953, %v948, %v736
      %v966 = vsel %vm953, %v949, %v738
      %v967 = vsel %vm953, %v950, %v740
      %v968 = vsel %vm953, %v951, %v742
      %v969 = vsel %vm953, %v952, %v744
      %vm970 = vcmask 228352
      %v971 = vsel %vm970, %v954, %v768
      %v972 = vsel %vm970, %v955, %v770
      %v973 = vsel %vm970, %v956, %v772
      %v974 = vsel %vm970, %v957, %v774
      %v975 = vsel %vm970, %v958, %v776
      %v976 = vsel %vm970, %v959, %v778
      %v977 = vsel %vm970, %v960, %v780
      %v978 = vsel %vm970, %v961, %v782
      %v979 = vsel %vm970, %v962, %v784
      %v980 = vsel %vm970, %v963, %v786
      %v981 = vsel %vm970, %v964, %v788
      %v982 = vsel %vm970, %v965, %v790
      %v983 = vsel %vm970, %v966, %v792
      %v984 = vsel %vm970, %v967, %v794
      %v985 = vsel %vm970, %v968, %v796
      %v986 = vsel %vm970, %v969, %v798
      %vm987 = vcmask 261120
      %v988 = vsel %vm987, %v971, %v821
      %v989 = vsel %vm987, %v972, %v823
      %v990 = vsel %vm987, %v973, %v825
      %v991 = vsel %vm987, %v974, %v827
      %v992 = vsel %vm987, %v975, %v829
      %v993 = vsel %vm987, %v976, %v831
      %v994 = vsel %vm987, %v977, %v833
      %v995 = vsel %vm987, %v978, %v835
      %v996 = vsel %vm987, %v979, %v837
      %v997 = vsel %vm987, %v980, %v839
      %v998 = vsel %vm987, %v981, %v841
      %v999 = vsel %vm987, %v982, %v843
      %v1000 = vsel %vm987, %v983, %v845
      %v1001 = vsel %vm987, %v984, %v847
      %v1002 = vsel %vm987, %v985, %v849
      %v1003 = vsel %vm987, %v986, %v851
      %v1004 = vld [vmem:[%s1] sm:$0xff]
      %v1005 = vld [vmem:[%s1 + $0x8] sm:$0xff]
      %v1006 = vld [vmem:[%s1 + $0x10] sm:$0xff]
      %v1007 = vld [vmem:[%s1 + $0x18] sm:$0xff]
      %v1008 = vld [vmem:[%s1 + $0x20] sm:$0xf]
      %v1009 = vld [vmem:[%s2] sm:$0x1]
      %v1011 = vlaneseq
      %v1012 = vshrl.u32 %v1011, 7
      %v1013 = vsub.s32 0, %v1012
      %v1014 = vrot.slane %v1009, %v1013
      %vm1016 = vcmask 293888
      %v1018 = vsel %vm1016, %v988, 0
      %v1021 = vsel %vm1016, %v989, 0
      %v1024 = vsel %vm1016, %v990, 0
      %v1027 = vsel %vm1016, %v991, 0
      %v1030 = vsel %vm1016, %v992, 0
      %v1033 = vsel %vm1016, %v993, 0
      %v1036 = vsel %vm1016, %v994, 0
      %v1039 = vsel %vm1016, %v995, 0
      %v1042 = vsel %vm1016, %v996, 0
      %v1045 = vsel %vm1016, %v997, 0
      %v1048 = vsel %vm1016, %v998, 0
      %v1051 = vsel %vm1016, %v999, 0
      %v1054 = vsel %vm1016, %v1000, 0
      %v1057 = vsel %vm1016, %v1001, 0
      %v1060 = vsel %vm1016, %v1002, 0
      %v1063 = vsel %vm1016, %v1003, 0
      %vm1065 = vcmask 1043456
      %v1067 = vsel %vm1065, %v1008, 0
      %1069 = vmatprep.subr.mxu0 0.0
      %1070 = vmatpush1.msra.mxu0 %v1004
      %1071 = vmatprep.subr.mxu0 0.0
      %1072 = vmatpush1.msra.mxu0 %v1005
      %1073 = vmatprep.subr.mxu0 0.0
      %1074 = vmatpush1.msra.mxu0 %v1006
      %1075 = vmatprep.subr.mxu0 0.0
      %1076 = vmatpush1.msra.mxu0 %v1007
      %1077 = vmatprep.subr.mxu0 0.0
      %1078 = vmatpush1.msra.mxu0 %v1067
      %1079 = vmatprep.subr.mxu0 0.0
      %1080 = vmatpush1.msra.mxu0 0.0
      %1081 = vmatprep.subr.mxu0 0.0
      %1082 = vmatpush1.msra.mxu0 0.0
      %1083 = vmatprep.subr.mxu0 0.0
      %1084 = vmatpush1.msra.mxu0 0.0
      %1085 = vmatprep.subr.mxu0 0.0
      %1086 = vmatpush1.msra.mxu0 0.0
      %1087 = vmatprep.subr.mxu0 0.0
      %1088 = vmatpush1.msra.mxu0 0.0
      %1089 = vmatprep.subr.mxu0 0.0
      %1090 = vmatpush1.msra.mxu0 0.0
      %1091 = vmatprep.subr.mxu0 0.0
      %1092 = vmatpush1.msra.mxu0 0.0
      %1093 = vmatprep.subr.mxu0 0.0
      %1094 = vmatpush1.msra.mxu0 0.0
      %1095 = vmatprep.subr.mxu0 0.0
      %1096 = vmatpush1.msra.mxu0 0.0
      %1097 = vmatprep.subr.mxu0 0.0
      %1098 = vmatpush1.msra.mxu0 0.0
      %1099 = vmatprep.subr.mxu0 0.0
      %1100 = vmatpush1.msra.mxu0 0.0
      %1101 = vmatprep.subr.mxu0 0.0
      %1102 = vmatpush1.msra.mxu0 0.0
      %1103 = vmatprep.subr.mxu0 0.0
      %1104 = vmatpush1.msra.mxu0 0.0
      %1105 = vmatprep.subr.mxu0 0.0
      %1106 = vmatpush1.msra.mxu0 0.0
      %1107 = vmatprep.subr.mxu0 0.0
      %1108 = vmatpush1.msra.mxu0 0.0
      %1109 = vmatprep.subr.mxu0 0.0
      %1110 = vmatpush1.msra.mxu0 0.0
      %1111 = vmatprep.subr.mxu0 0.0
      %1112 = vmatpush1.msra.mxu0 0.0
      %1113 = vmatprep.subr.mxu0 0.0
      %1114 = vmatpush1.msra.mxu0 0.0
      %1115 = vmatprep.subr.mxu0 0.0
      %1116 = vmatpush1.msra.mxu0 0.0
      %1117 = vmatprep.subr.mxu0 0.0
      %1118 = vmatpush1.msra.mxu0 0.0
      %1119 = vmatprep.subr.mxu0 0.0
      %1120 = vmatpush1.msra.mxu0 0.0
      %1121 = vmatprep.subr.mxu0 0.0
      %1122 = vmatpush1.msra.mxu0 0.0
      %1123 = vmatprep.subr.mxu0 0.0
      %1124 = vmatpush1.msra.mxu0 0.0
      %1125 = vmatprep.subr.mxu0 0.0
      %1126 = vmatpush1.msra.mxu0 0.0
      %1127 = vmatprep.subr.mxu0 0.0
      %1128 = vmatpush1.msra.mxu0 0.0
      %1129 = vmatprep.subr.mxu0 0.0
      %1130 = vmatpush1.msra.mxu0 0.0
      %1131 = vmatprep.subr.mxu0 0.0
      %1132 = vmatpush1.msra.mxu0 0.0
      %1133 = vmatprep.mubr.f32.mxu0 0.0
      %1134 = vmatmul.mubr.f32.gmra.mrb[0].mxu0 %v1018
      %v1135 = vpop.f32.mrb[0].mxu0
      %v1136 = vadd.f32 %v1014, %v1135
      %v1137 = vpop.f32.mrb[0].mxu0
      %1138 = vmatprep.mubr.f32.mxu0 0.0
      %1139 = vmatmul.mubr.f32.gmra.mrb[0].mxu0 %v1021
      %v1140 = vpop.f32.mrb[0].mxu0
      %v1141 = vadd.f32 %v1014, %v1140
      %v1142 = vpop.f32.mrb[0].mxu0
      %1143 = vmatprep.mubr.f32.mxu0 0.0
      %1144 = vmatmul.mubr.f32.gmra.mrb[0].mxu0 %v1024
      %v1145 = vpop.f32.mrb[0].mxu0
      %v1146 = vadd.f32 %v1014, %v1145
      %v1147 = vpop.f32.mrb[0].mxu0
      %1148 = vmatprep.mubr.f32.mxu0 0.0
      %1149 = vmatmul.mubr.f32.gmra.mrb[0].mxu0 %v1027
      %v1150 = vpop.f32.mrb[0].mxu0
      %v1151 = vadd.f32 %v1014, %v1150
      %v1152 = vpop.f32.mrb[0].mxu0
      %1153 = vmatprep.mubr.f32.mxu0 0.0
      %1154 = vmatmul.mubr.f32.gmra.mrb[0].mxu0 %v1030
      %v1155 = vpop.f32.mrb[0].mxu0
      %v1156 = vadd.f32 %v1014, %v1155
      %v1157 = vpop.f32.mrb[0].mxu0
      %1158 = vmatprep.mubr.f32.mxu0 0.0
      %1159 = vmatmul.mubr.f32.gmra.mrb[0].mxu0 %v1033
      %v1160 = vpop.f32.mrb[0].mxu0
      %v1161 = vadd.f32 %v1014, %v1160
      %v1162 = vpop.f32.mrb[0].mxu0
      %1163 = vmatprep.mubr.f32.mxu0 0.0
      %1164 = vmatmul.mubr.f32.gmra.mrb[0].mxu0 %v1036
      %v1165 = vpop.f32.mrb[0].mxu0
      %v1166 = vadd.f32 %v1014, %v1165
      %v1167 = vpop.f32.mrb[0].mxu0
      %1168 = vmatprep.mubr.f32.mxu0 0.0
      %1169 = vmatmul.mubr.f32.gmra.mrb[0].mxu0 %v1039
      %v1170 = vpop.f32.mrb[0].mxu0
      %v1171 = vadd.f32 %v1014, %v1170
      %v1172 = vpop.f32.mrb[0].mxu0
      %1173 = vmatprep.mubr.f32.mxu0 0.0
      %1174 = vmatmul.mubr.f32.gmra.mrb[0].mxu0 %v1042
      %v1175 = vpop.f32.mrb[0].mxu0
      %v1176 = vadd.f32 %v1014, %v1175
      %v1177 = vpop.f32.mrb[0].mxu0
      %1178 = vmatprep.mubr.f32.mxu0 0.0
      %1179 = vmatmul.mubr.f32.gmra.mrb[0].mxu0 %v1045
      %v1180 = vpop.f32.mrb[0].mxu0
      %v1181 = vadd.f32 %v1014, %v1180
      %v1182 = vpop.f32.mrb[0].mxu0
      %1183 = vmatprep.mubr.f32.mxu0 0.0
      %1184 = vmatmul.mubr.f32.gmra.mrb[0].mxu0 %v1048
      %v1185 = vpop.f32.mrb[0].mxu0
      %v1186 = vadd.f32 %v1014, %v1185
      %v1187 = vpop.f32.mrb[0].mxu0
      %1188 = vmatprep.mubr.f32.mxu0 0.0
      %1189 = vmatmul.mubr.f32.gmra.mrb[0].mxu0 %v1051
      %v1190 = vpop.f32.mrb[0].mxu0
      %v1191 = vadd.f32 %v1014, %v1190
      %v1192 = vpop.f32.mrb[0].mxu0
      %1193 = vmatprep.mubr.f32.mxu0 0.0
      %1194 = vmatmul.mubr.f32.gmra.mrb[0].mxu0 %v1054
      %v1195 = vpop.f32.mrb[0].mxu0
      %v1196 = vadd.f32 %v1014, %v1195
      %v1197 = vpop.f32.mrb[0].mxu0
      %1198 = vmatprep.mubr.f32.mxu0 0.0
      %1199 = vmatmul.mubr.f32.gmra.mrb[0].mxu0 %v1057
      %v1200 = vpop.f32.mrb[0].mxu0
      %v1201 = vadd.f32 %v1014, %v1200
      %v1202 = vpop.f32.mrb[0].mxu0
      %1203 = vmatprep.mubr.f32.mxu0 0.0
      %1204 = vmatmul.mubr.f32.gmra.mrb[0].mxu0 %v1060
      %v1205 = vpop.f32.mrb[0].mxu0
      %v1206 = vadd.f32 %v1014, %v1205
      %v1207 = vpop.f32.mrb[0].mxu0
      %1208 = vmatprep.mubr.f32.mxu0 0.0
      %1209 = vmatmul.mubr.f32.gmra.mrb[0].mxu0 %v1063
      %v1210 = vpop.f32.mrb[0].mxu0
      %v1211 = vadd.f32 %v1014, %v1210
      %v1212 = vpop.f32.mrb[0].mxu0
      %1213 = vdwg.mxu0
      %1214 = vst.msk [vmem:[%s192] sm:$0xff] %vm885, %v1136
      %1215 = vst.msk [vmem:[%s192 + $0x8] sm:$0xff] %vm885, %v1141
      %1216 = vst.msk [vmem:[%s192 + $0x10] sm:$0xff] %vm885, %v1146
      %1217 = vst.msk [vmem:[%s192 + $0x18] sm:$0xff] %vm885, %v1151
      %1218 = vst.msk [vmem:[%s192 + $0x20] sm:$0xff] %vm885, %v1156
      %1219 = vst.msk [vmem:[%s192 + $0x28] sm:$0xff] %vm885, %v1161
      %1220 = vst.msk [vmem:[%s192 + $0x30] sm:$0xff] %vm885, %v1166
      %1221 = vst.msk [vmem:[%s192 + $0x38] sm:$0xff] %vm885, %v1171
      %1222 = vst.msk [vmem:[%s192 + $0x40] sm:$0xff] %vm885, %v1176
      %1223 = vst.msk [vmem:[%s192 + $0x48] sm:$0xff] %vm885, %v1181
      %1224 = vst.msk [vmem:[%s192 + $0x50] sm:$0xff] %vm885, %v1186
      %1225 = vst.msk [vmem:[%s192 + $0x58] sm:$0xff] %vm885, %v1191
      %1226 = vst.msk [vmem:[%s192 + $0x60] sm:$0xff] %vm885, %v1196
      %1227 = vst.msk [vmem:[%s192 + $0x68] sm:$0xff] %vm885, %v1201
      %1228 = vst.msk [vmem:[%s192 + $0x70] sm:$0xff] %vm885, %v1206
      %1229 = vst.msk [vmem:[%s192 + $0x78] sm:$0xff] %vm885, %v1211
      %s1230 = smul.u32 16, %s19
      %p1231 = scmp.lt.s32.totalorder %s18, 1
      %s1232 = scalar_select %p1231, %s18, 1
      %p1233 = scmp.lt.s32.totalorder %s1230, 31
      %s1234 = scalar_select %p1233, %s1230, 31
      %s1235 = smul.addr %s1232, 32
      %s1236 = sadd.s32 %s1234, %s1235
      %s1237 = smul.addr %s1236, 8
      %s1238 = scalar_lea.vmem %s3, %s1237
      // Predicated region
      $region37: #{tpu_custom_call.1} parent=31 // pred_check
        %p1239 = pneg %p114
      $region38: #{tpu_custom_call.1} parent=31 // pred_check_branch
        %1241 = sbr.rel (%p1239) target = $region40
      $region39: #{tpu_custom_call.1} parent=31 // pred_region
        %s1242 = smul.u32 16, %s19
      $region40: #{tpu_custom_call.1} parent=31 // pred_fallthru
        _
    $region32: #{tpu_custom_call.1} parent=5 // pred_fallthru
      _
    %p1243 = scmp.le.s32.totalorder 2, %s9
    // Predicated region
    $region41: #{tpu_custom_call.1} parent=5 // pred_check
      %p1244 = pneg %p1243
    $region42: #{tpu_custom_call.1} parent=5 // pred_check_branch
      %1246 = sbr.rel (%p1244) target = $region44
    $region43: #{tpu_custom_call.1} parent=5 // pred_region
      %s1247 = ssub.s32 %s9, 2
      // Predicated region
      $region45: #{tpu_custom_call.1} parent=43 // pred_check
        %p1248 = pneg %p120
      $region46: #{tpu_custom_call.1} parent=43 // pred_check_branch
        %1250 = sbr.rel (%p1248) target = $region48
      $region47: #{tpu_custom_call.1} parent=43 // pred_region
        %s1251 = smul.u32 16, %s21
        %p1252 = scmp.lt.s32.totalorder %s20, 1
        %s1253 = scalar_select %p1252, %s20, 1
        %p1254 = scmp.lt.s32.totalorder %s1251, 31
        %s1255 = scalar_select %p1254, %s1251, 31
        %s1256 = smul.addr %s1253, 32
        %s1257 = sadd.s32 %s1255, %s1256
        %s1258 = smul.addr %s1257, 8
        %s1259 = scalar_lea.vmem %s3, %s1258
      $region48: #{tpu_custom_call.1} parent=43 // pred_fallthru
        _
    $region44: #{tpu_custom_call.1} parent=5 // pred_fallthru
      _
  $region6: #{tpu_custom_call.1} parent=0 // loop_footer
    %s13 = sadd.s32 1, %s9
  $region7: #{tpu_custom_call.1} parent=0 // loop_footer_branch
    %8 = sbr.rel target = $region3
  $region8: #{tpu_custom_call.1} parent=0 // loop_exit
    _

</llo_original>
